<compile_context>
chip_gen: v7x
topology: tpu7x:2x2x1
jax: 0.10.0
libtpu: 0.0.40
codegen_flags: <defaults>
</compile_context>

<pallas_src>
import functools

import jax
import jax.numpy as jnp
from jax import lax
from jax.experimental import pallas as pl
from jax.experimental.pallas import tpu as pltpu


def mlp_kernel(x_ref, wfc_ref, wproj_ref, o_ref, *, block_h, n_chunks):
    # x_ref:     (tm, C)  bf16 token tile (streamed per grid step)
    # wfc_ref:   (C, H)   bf16, VMEM-resident (W_fc pre-transposed)
    # wproj_ref: (H, C)   bf16, VMEM-resident (W_proj pre-transposed)
    # o_ref:     (tm, C)  output tile (original dtype)
    x = x_ref[...]
    tm = x_ref.shape[0]
    C = wproj_ref.shape[1]

    def chunk(wfc_blk, wproj_blk, acc):
        # (tm, C) @ (C, th) -> (tm, th); f32 accumulation on the MXU.
        h = jnp.dot(x, wfc_blk, preferred_element_type=jnp.float32)
        h = jnp.maximum(h, 0.0)
        h = h * h  # relu(h) ** 2
        # (tm, th) @ (th, C) -> (tm, C)
        return acc + jnp.dot(h.astype(jnp.bfloat16), wproj_blk,
                             preferred_element_type=jnp.float32)

    zero = jnp.zeros((tm, C), jnp.float32)
    if n_chunks == 1:
        acc = chunk(wfc_ref[...], wproj_ref[...], zero)
    else:
        def body(k, acc):
            hk = pl.multiple_of(k * block_h, block_h)  # 128-lane aligned start
            return chunk(wfc_ref[:, pl.ds(hk, block_h)],
                         wproj_ref[pl.ds(hk, block_h), :],
                         acc)
        acc = lax.fori_loop(0, n_chunks, body, zero)

    o_ref[...] = acc.astype(o_ref.dtype)


def _round_up(n: int, m: int) -> int:
    return ((n + m - 1) // m) * m


def _pick_token_tile(M: int, target: int) -> int:
    """Token tile: prefer a divisor of M (no padding copy), 128-grain, else pad."""
    if M <= target:
        return _round_up(M, 8)
    start = max((target // 128) * 128, 128)
    for tm in range(start, 127, -128):
        if M % tm == 0:
            return tm
    return start  # ragged tail handled by padding in the wrapper


def _pick_hidden_tile(H: int, target: int) -> int:
    """Hidden chunk: largest lane-aligned (x128) divisor of H that is <= target."""
    if H <= target:
        return H
    start = max((target // 128) * 128, 128)
    for th in range(start, 127, -128):
        if H % th == 0:
            return th
    return H  # no lane-aligned divisor: fall back to a single full-H chunk


def prepare_weights(w_fc, w_proj):
    """One-time weight prep (call outside the hot loop).

    Transposes PyTorch (out, in) layouts to MXU-native (K, N) and casts to
    bf16 so the kernel never re-transposes or re-casts weights per call.
      w_fc   (4C, C) -> (C, 4C) bf16
      w_proj (C, 4C) -> (4C, C) bf16
    """
    return w_fc.T.astype(jnp.bfloat16), w_proj.T.astype(jnp.bfloat16)


@functools.partial(jax.jit, static_argnames=("block_m", "block_h"))
def mlp_pallas(x, wfc_t, wproj_t, block_m: int = 512, block_h: int = 512):
    """GPT-2 MLP forward.

    x:       (B, T, C) float32/bf16
    wfc_t:   (C, 4C) bf16   (from prepare_weights)
    wproj_t: (4C, C) bf16   (from prepare_weights)
    """
    B, T, C = x.shape
    H = wfc_t.shape[1]
    assert wfc_t.shape == (C, H) and wproj_t.shape == (H, C)
    M = B * T

    tm = _pick_token_tile(M, block_m)
    th = _pick_hidden_tile(H, block_h)
    m_pad = _round_up(M, tm)

    # bf16 activations into the kernel: halves x DMA + removes in-kernel casts.
    x2 = x.reshape(M, C).astype(jnp.bfloat16)
    if m_pad != M:
        x2 = jnp.pad(x2, ((0, m_pad - M), (0, 0)))

    grid = (m_pad // tm,)
    kernel = functools.partial(mlp_kernel, block_h=th, n_chunks=H // th)

    out2 = pl.pallas_call(
        kernel,
        out_shape=jax.ShapeDtypeStruct((m_pad, C), x.dtype),
        grid_spec=pltpu.PrefetchScalarGridSpec(
            num_scalar_prefetch=0,
            grid=grid,
            in_specs=[
                # Streamed token tile.
                pl.BlockSpec((tm, C), lambda i: (i, 0)),
                # Resident weights: constant block index => fetched once total.
                pl.BlockSpec((C, H), lambda i: (0, 0)),
                pl.BlockSpec((H, C), lambda i: (0, 0)),
            ],
            out_specs=pl.BlockSpec((tm, C), lambda i: (i, 0)),
        ),
        compiler_params=pltpu.CompilerParams(
            dimension_semantics=("parallel",),          # megacore over M tiles
            vmem_limit_bytes=48 * 1024 * 1024),
    )(x2, wfc_t, wproj_t)

    if m_pad != M:
        out2 = out2[:M]
    return out2.reshape(B, T, C)


def mlp_reference(x, w_fc, w_proj):
    h = jnp.einsum("btc,hc->bth", x, w_fc)
    h = jnp.square(jnp.maximum(h, 0.0))
    return jnp.einsum("bth,ch->btc", h, w_proj)


if __name__ == "__main__":
    # Small, module-consistent shapes: batch=2, seq=8, n_embd=32, hidden=128.
    # (Real GPT-2 uses C=768, H=3072 where tm=512 / th=512 tiling applies.)
    B, T, C = 2, 8, 32
    H = 4 * C

    key = jax.random.PRNGKey(0)
    kx, kfc, kproj = jax.random.split(key, 3)
    x = jax.random.normal(kx, (B, T, C), dtype=jnp.float32)

    bound = 1.0 / (C ** 0.5)
    w_fc = jax.random.uniform(kfc, (H, C), minval=-bound, maxval=bound,
                              dtype=jnp.float32)

    # 1) Module init: c_proj is zero -> output is exactly zero.
    w_proj0 = jnp.zeros((C, H), dtype=jnp.float32)
    wfc_t, wproj_t = prepare_weights(w_fc, w_proj0)
    y0 = jax.block_until_ready(mlp_pallas(x, wfc_t, wproj_t))
    assert y0.shape == (B, T, C)
    assert jnp.allclose(y0, jnp.zeros_like(y0))

    # 2) Non-zero projection exercises the full fused path (bf16 MXU inputs,
    #    f32 accumulation -> loosened tolerance vs. the f32 reference).
    w_proj = jax.random.normal(kproj, (C, H), dtype=jnp.float32) * 0.02
    wfc_t, wproj_t = prepare_weights(w_fc, w_proj)
    y = jax.block_until_ready(mlp_pallas(x, wfc_t, wproj_t))
    y_ref = mlp_reference(x, w_fc, w_proj)
    assert jnp.allclose(y, y_ref, atol=5e-2, rtol=5e-2), (
        float(jnp.max(jnp.abs(y - y_ref))))

    # 3) Ragged token count (M=5) exercises the padded-tile path.
    xr = jax.random.normal(jax.random.PRNGKey(1), (1, 5, C), dtype=jnp.float32)
    yr = jax.block_until_ready(mlp_pallas(xr, wfc_t, wproj_t))
    yr_ref = mlp_reference(xr, w_fc, w_proj)
    assert jnp.allclose(yr, yr_ref, atol=5e-2, rtol=5e-2)

    # 4) Multi-chunk hidden reduction (n_chunks > 1) exercises the in-kernel
    #    pl.ds slicing of the resident weights.
    C2 = 64
    H2 = 4 * C2
    k2x, k2fc, k2pr = jax.random.split(jax.random.PRNGKey(2), 3)
    xc = jax.random.normal(k2x, (2, 8, C2), dtype=jnp.float32)
    w_fc2 = jax.random.uniform(k2fc, (H2, C2), minval=-0.1, maxval=0.1,
                               dtype=jnp.float32)
    w_pr2 = jax.random.normal(k2pr, (C2, H2), dtype=jnp.float32) * 0.02
    wfc2_t, wpr2_t = prepare_weights(w_fc2, w_pr2)
    y2 = jax.block_until_ready(mlp_pallas(xc, wfc2_t, wpr2_t, block_h=128))
    y2_ref = mlp_reference(xc, w_fc2, w_pr2)
    assert jnp.allclose(y2, y2_ref, atol=5e-2, rtol=5e-2), (
        float(jnp.max(jnp.abs(y2 - y2_ref))))

    print("KERNEL_OK")
</pallas_src>

<mosaic_0001>
module attributes {stable_mosaic.version = 11 : i64} {
  func.func @mlp_kernel(%arg0: i32, %arg1: memref<16x32xbf16, #tpu.memory_space<vmem>>, %arg2: memref<32x128xbf16, #tpu.memory_space<vmem>>, %arg3: memref<128x32xbf16, #tpu.memory_space<vmem>>, %arg4: memref<16x32xf32, #tpu.memory_space<vmem>>) attributes {dimension_semantics = [#tpu.dimension_semantics<parallel>], iteration_bounds = array<i64: 1>, scalar_prefetch = 0 : i64, scratch_operands = 0 : i64, tpu.core_type = #tpu.core_type<tc>, window_params = [{transform_indices = @transform_0, window_bounds = array<i64: 16, 32>}, {pipeline_mode = #tpu.pipeline_mode<synchronous>, transform_indices = @transform_1, window_bounds = array<i64: 32, 128>}, {pipeline_mode = #tpu.pipeline_mode<synchronous>, transform_indices = @transform_2, window_bounds = array<i64: 128, 32>}, {transform_indices = @transform_3, window_bounds = array<i64: 16, 32>}]} {
    %c0 = arith.constant 0 : index
    %c0_0 = arith.constant 0 : index
    %0 = vector.load %arg1[%c0, %c0_0] : memref<16x32xbf16, #tpu.memory_space<vmem>>, vector<16x32xbf16>
    %cst = arith.constant 0.000000e+00 : f32
    %1 = vector.broadcast %cst : f32 to vector<16x32xf32>
    %c0_1 = arith.constant 0 : index
    %c0_2 = arith.constant 0 : index
    %2 = vector.load %arg2[%c0_1, %c0_2] : memref<32x128xbf16, #tpu.memory_space<vmem>>, vector<32x128xbf16>
    %c0_3 = arith.constant 0 : index
    %c0_4 = arith.constant 0 : index
    %3 = vector.load %arg3[%c0_3, %c0_4] : memref<128x32xbf16, #tpu.memory_space<vmem>>, vector<128x32xbf16>
    %cst_5 = arith.constant dense<0.000000e+00> : vector<16x128xf32>
    %4 = tpu.matmul %0, %2, %cst_5 {dimension_numbers = #tpu.dot_dimension_numbers<[1], [0], [0], [1], [0, 0, 1, 1], [], []>} : vector<16x32xbf16>, vector<32x128xbf16>, vector<16x128xf32> -> vector<16x128xf32>
    %cst_6 = arith.constant 0.000000e+00 : f32
    %5 = vector.broadcast %cst_6 : f32 to vector<16x128xf32>
    %6 = arith.maximumf %4, %5 : vector<16x128xf32>
    %7 = arith.mulf %6, %6 : vector<16x128xf32>
    %8 = arith.truncf %7 : vector<16x128xf32> to vector<16x128xbf16>
    %cst_7 = arith.constant dense<0.000000e+00> : vector<16x32xf32>
    %9 = tpu.matmul %8, %3, %cst_7 {dimension_numbers = #tpu.dot_dimension_numbers<[1], [0], [0], [1], [0, 0, 1, 1], [], []>} : vector<16x128xbf16>, vector<128x32xbf16>, vector<16x32xf32> -> vector<16x32xf32>
    %10 = arith.addf %1, %9 : vector<16x32xf32>
    %c0_8 = arith.constant 0 : index
    %c0_9 = arith.constant 0 : index
    %11 = vector.load %arg4[%c0_8, %c0_9] : memref<16x32xf32, #tpu.memory_space<vmem>>, vector<16x32xf32>
    tpu.vector_store %arg4[%c0_8, %c0_9], %10 {strides = array<i32>} : memref<16x32xf32, #tpu.memory_space<vmem>>, vector<16x32xf32>,
    return
  }
  func.func @transform_0(%arg0: i32) -> (i32, i32) {
    %c0_i32 = arith.constant 0 : i32
    %c0_i32_0 = arith.constant 0 : i32
    return %arg0, %c0_i32 : i32, i32
  }
  func.func @transform_1(%arg0: i32) -> (i32, i32) {
    %c0_i32 = arith.constant 0 : i32
    %c0_i32_0 = arith.constant 0 : i32
    %c0_i32_1 = arith.constant 0 : i32
    return %c0_i32, %c0_i32_0 : i32, i32
  }
  func.func @transform_2(%arg0: i32) -> (i32, i32) {
    %c0_i32 = arith.constant 0 : i32
    %c0_i32_0 = arith.constant 0 : i32
    %c0_i32_1 = arith.constant 0 : i32
    return %c0_i32, %c0_i32_0 : i32, i32
  }
  func.func @transform_3(%arg0: i32) -> (i32, i32) {
    %c0_i32 = arith.constant 0 : i32
    %c0_i32_0 = arith.constant 0 : i32
    return %arg0, %c0_i32 : i32, i32
  }
}

</mosaic_0001>

<llo_original>
// kernel: mlp_pallas.1
$region0: #{mlp_pallas.1}
  #allocation0 [shape = 'u32[]', space=smem, size = 0x4, offset = 0x4, fixed_abs, tag = 'smem constant byte address 0x4 - core index']
  #allocation1 [shape = 'u32[144,128]{1,0:T(1,128)}', space=vmem, size = 0x12000, scoped, tag = 'internal scratch']
  %s0 = inlined_call_operand.vmem [shape: bf16[16,32], index: 0, kind: input, shape index: {}]
  %s1 = inlined_call_operand.vmem [shape: bf16[32,128], index: 1, kind: input, shape index: {}]
  %s2 = inlined_call_operand.vmem [shape: bf16[128,32], index: 2, kind: input, shape index: {}]
  %s3 = inlined_call_operand.hbm [shape: f32[16,32], index: 3, kind: output, shape index: {}]
  %s4 = sld [smem:[#allocation0]]
  $region22: #{mlp_pallas.1} parent=0
    _
  %s6 = ssub.s32 1, %s4
  %s7 = scalar_select 0, %s6, %s4
  $region1: #{mlp_pallas.1} parent=0
    #allocation2 [shape = 'u8[8192]{0}', space=vmem, size = 0x2000, scoped, tag = 'output window, operand 0, single buffered']
    #allocation3 [shape = 's32[1]{0}', space=sflag, size = 0x4, scoped, tag = 'scoped memory for mlp_pallas.1']
    %8 = vsyncpa [#allocation3], 0
    // Predicated region
    $region2: #{mlp_pallas.1} parent=1 // pred_check
      _
    $region3: #{mlp_pallas.1} parent=1 // pred_check_branch
      %10 = sbr.rel (0) target = $region5
    $region4: #{mlp_pallas.1} parent=1 // pred_region
      _
    $region5: #{mlp_pallas.1} parent=1 // pred_fallthru
      _
    // Predicated region
    $region6: #{mlp_pallas.1} parent=1 // pred_check
      _
    $region7: #{mlp_pallas.1} parent=1 // pred_check_branch
      %12 = sbr.rel (0) target = $region9
    $region8: #{mlp_pallas.1} parent=1 // pred_region
      _
    $region9: #{mlp_pallas.1} parent=1 // pred_fallthru
      _
    // Predicated region
    $region10: #{mlp_pallas.1} parent=1 // pred_check
      _
    $region11: #{mlp_pallas.1} parent=1 // pred_check_branch
      %14 = sbr.rel (0) target = $region13
    $region12: #{mlp_pallas.1} parent=1 // pred_region
      _
    $region13: #{mlp_pallas.1} parent=1 // pred_fallthru
      _
    %v16 = vld [vmem:[%s0] sm:$0xf]
    %v17 = vld [vmem:[%s0 + $0x4] sm:$0xf]
    %v18 = vld [vmem:[%s1] sm:$0xf]
    %v19 = vld [vmem:[%s1 + $0x4] sm:$0xf]
    %v20 = vld [vmem:[%s1 + $0x8] sm:$0xf]
    %v21 = vld [vmem:[%s1 + $0xc] sm:$0xf]
    %v22 = vld [vmem:[%s2] sm:$0xf]
    %v23 = vld [vmem:[%s2 + $0x4] sm:$0xf]
    %v24 = vld [vmem:[%s2 + $0x8] sm:$0xf]
    %v25 = vld [vmem:[%s2 + $0xc] sm:$0xf]
    %v26 = vld [vmem:[%s2 + $0x10] sm:$0xf]
    %v27 = vld [vmem:[%s2 + $0x14] sm:$0xf]
    %v28 = vld [vmem:[%s2 + $0x18] sm:$0xf]
    %v29 = vld [vmem:[%s2 + $0x1c] sm:$0xf]
    %v30 = vld [vmem:[%s2 + $0x20] sm:$0xf]
    %v31 = vld [vmem:[%s2 + $0x24] sm:$0xf]
    %v32 = vld [vmem:[%s2 + $0x28] sm:$0xf]
    %v33 = vld [vmem:[%s2 + $0x2c] sm:$0xf]
    %v34 = vld [vmem:[%s2 + $0x30] sm:$0xf]
    %v35 = vld [vmem:[%s2 + $0x34] sm:$0xf]
    %v36 = vld [vmem:[%s2 + $0x38] sm:$0xf]
    %v37 = vld [vmem:[%s2 + $0x3c] sm:$0xf]
    %v40 = vunpack.c.l.b16 %v16
    %v41 = vunpack.c.l.b16 %v17
    %v42 = vpack.c.b16 %v41, %v40
    %v47 = vunpack.c.l.b16 %v18
    %v48 = vunpack.c.l.b16 %v19
    %v49 = vunpack.c.l.b16 %v20
    %v50 = vunpack.c.l.b16 %v21
    %v51 = vpack.c.b16 %v48, %v47
    %v52 = vpack.c.b16 %v50, %v49
    %vm55 = vcmask 261120
    %v57 = vsel %vm55, %v42, 0
    %59 = vmatprep.subr.bf16.mxu0 0
    %60 = vmatpush1.bf16.msra.mxu0 %v51
    %61 = vmatprep.subr.bf16.mxu0 0
    %62 = vmatpush1.bf16.msra.mxu0 %v52
    %63 = vmatprep.subr.bf16.mxu0 0
    %64 = vmatpush1.bf16.msra.mxu0 0
    %65 = vmatprep.subr.bf16.mxu0 0
    %66 = vmatpush1.bf16.msra.mxu0 0
    %67 = vmatprep.subr.bf16.mxu0 0
    %68 = vmatpush1.bf16.msra.mxu0 0
    %69 = vmatprep.subr.bf16.mxu0 0
    %70 = vmatpush1.bf16.msra.mxu0 0
    %71 = vmatprep.subr.bf16.mxu0 0
    %72 = vmatpush1.bf16.msra.mxu0 0
    %73 = vmatprep.subr.bf16.mxu0 0
    %74 = vmatpush1.bf16.msra.mxu0 0
    %75 = vmatprep.subr.bf16.mxu0 0
    %76 = vmatpush1.bf16.msra.mxu0 0
    %77 = vmatprep.subr.bf16.mxu0 0
    %78 = vmatpush1.bf16.msra.mxu0 0
    %79 = vmatprep.subr.bf16.mxu0 0
    %80 = vmatpush1.bf16.msra.mxu0 0
    %81 = vmatprep.subr.bf16.mxu0 0
    %82 = vmatpush1.bf16.msra.mxu0 0
    %83 = vmatprep.subr.bf16.mxu0 0
    %84 = vmatpush1.bf16.msra.mxu0 0
    %85 = vmatprep.subr.bf16.mxu0 0
    %86 = vmatpush1.bf16.msra.mxu0 0
    %87 = vmatprep.subr.bf16.mxu0 0
    %88 = vmatpush1.bf16.msra.mxu0 0
    %89 = vmatprep.subr.bf16.mxu0 0
    %90 = vmatpush1.bf16.msra.mxu0 0
    %91 = vmatprep.mubr.bf16.mxu0 0
    %92 = vmatmul.mubr.bf16.gmra.mrb[0].mxu0 %v57
    %v93 = vpop.f32.mrb[0].mxu0
    %v94 = vadd.f32 0.0, %v93
    %v95 = vpop.f32.mrb[0].mxu0
    %v96 = vpop.f32.mrb[0].mxu0
    %v97 = vadd.f32 0.0, %v96
    %v98 = vpop.f32.mrb[0].mxu0
    %99 = vdwg.mxu0
    %v100 = vmax.f32 %v94, 0.0
    %v101 = vmax.f32 %v97, 0.0
    %v102 = vmul.f32 %v100, %v100
    %v103 = vmul.f32 %v101, %v101
    %v104 = vpack.c.bf16 %v103, %v102
    %v121 = vunpack.c.l.b16 %v22
    %v122 = vunpack.c.l.b16 %v23
    %v123 = vunpack.c.l.b16 %v24
    %v124 = vunpack.c.l.b16 %v25
    %v125 = vunpack.c.l.b16 %v26
    %v126 = vunpack.c.l.b16 %v27
    %v127 = vunpack.c.l.b16 %v28
    %v128 = vunpack.c.l.b16 %v29
    %v129 = vunpack.c.l.b16 %v30
    %v130 = vunpack.c.l.b16 %v31
    %v131 = vunpack.c.l.b16 %v32
    %v132 = vunpack.c.l.b16 %v33
    %v133 = vunpack.c.l.b16 %v34
    %v134 = vunpack.c.l.b16 %v35
    %v135 = vunpack.c.l.b16 %v36
    %v136 = vunpack.c.l.b16 %v37
    %v137 = vpack.c.b16 %v122, %v121
    %v138 = vpack.c.b16 %v124, %v123
    %v139 = vpack.c.b16 %v126, %v125
    %v140 = vpack.c.b16 %v128, %v127
    %v141 = vpack.c.b16 %v130, %v129
    %v142 = vpack.c.b16 %v132, %v131
    %v143 = vpack.c.b16 %v134, %v133
    %v144 = vpack.c.b16 %v136, %v135
    %153 = vmatprep.subr.bf16.mxu0 0
    %154 = vmatpush1.bf16.msra.mxu0 %v137
    %155 = vmatprep.subr.bf16.mxu0 0
    %156 = vmatpush1.bf16.msra.mxu0 %v138
    %157 = vmatprep.subr.bf16.mxu0 0
    %158 = vmatpush1.bf16.msra.mxu0 %v139
    %159 = vmatprep.subr.bf16.mxu0 0
    %160 = vmatpush1.bf16.msra.mxu0 %v140
    %161 = vmatprep.subr.bf16.mxu0 0
    %162 = vmatpush1.bf16.msra.mxu0 %v141
    %163 = vmatprep.subr.bf16.mxu0 0
    %164 = vmatpush1.bf16.msra.mxu0 %v142
    %165 = vmatprep.subr.bf16.mxu0 0
    %166 = vmatpush1.bf16.msra.mxu0 %v143
    %167 = vmatprep.subr.bf16.mxu0 0
    %168 = vmatpush1.bf16.msra.mxu0 %v144
    %169 = vmatprep.subr.bf16.mxu0 0
    %170 = vmatpush1.bf16.msra.mxu0 0
    %171 = vmatprep.subr.bf16.mxu0 0
    %172 = vmatpush1.bf16.msra.mxu0 0
    %173 = vmatprep.subr.bf16.mxu0 0
    %174 = vmatpush1.bf16.msra.mxu0 0
    %175 = vmatprep.subr.bf16.mxu0 0
    %176 = vmatpush1.bf16.msra.mxu0 0
    %177 = vmatprep.subr.bf16.mxu0 0
    %178 = vmatpush1.bf16.msra.mxu0 0
    %179 = vmatprep.subr.bf16.mxu0 0
    %180 = vmatpush1.bf16.msra.mxu0 0
    %181 = vmatprep.subr.bf16.mxu0 0
    %182 = vmatpush1.bf16.msra.mxu0 0
    %183 = vmatprep.subr.bf16.mxu0 0
    %184 = vmatpush1.bf16.msra.mxu0 0
    %185 = vmatprep.mubr.bf16.mxu0 0
    %186 = vmatmul.mubr.bf16.gmra.mrb[0].mxu0 %v104
    %v187 = vpop.f32.mrb[0].mxu0
    %v188 = vadd.f32 0.0, %v187
    %v189 = vpop.f32.mrb[0].mxu0
    %v190 = vpop.f32.mrb[0].mxu0
    %v191 = vadd.f32 0.0, %v190
    %v192 = vpop.f32.mrb[0].mxu0
    %193 = vdwg.mxu0
    %194 = vst.msk [vmem:[#allocation2] sm:$0xff] %vm55, %v188
    %195 = vst.msk [vmem:[#allocation2 + $0x8] sm:$0xff] %vm55, %v191
    // Predicated region
    $region14: #{mlp_pallas.1} parent=1 // pred_check
      _
    $region15: #{mlp_pallas.1} parent=1 // pred_check_branch
      %197 = sbr.rel (0) target = $region17
    $region16: #{mlp_pallas.1} parent=1 // pred_region
      %s199 = ssub.s32 256, 256
      %200 = vsyncadd [#allocation3], %s199
      %s201 = sshll.u32 [#allocation2], 4
      %s202 = int_to_ptr.vmem [resolvable:$true] %s201
      %207 = dma.vmem_to_hbm [thread:$0]  %s202, 256, %s3, [#allocation3], 128, 128, 8
    $region17: #{mlp_pallas.1} parent=1 // pred_fallthru
      _
    // Predicated region
    $region18: #{mlp_pallas.1} parent=1 // pred_check
      _
    $region19: #{mlp_pallas.1} parent=1 // pred_check_branch
      %209 = sbr.rel (0) target = $region21
    $region20: #{mlp_pallas.1} parent=1 // pred_region
      %210 = dma.done [#allocation3], 256
    $region21: #{mlp_pallas.1} parent=1 // pred_fallthru
      _
    %211 = vsyncpa [#allocation3], 1

</llo_original>
